<compile_context>
chip_gen: v6e
topology: v6e:2x2x1
jax: 0.10.0
libtpu: 0.0.40
codegen_flags: <defaults>
</compile_context>

<pallas_src>
import functools

import jax
import jax.numpy as jnp
from jax import lax
from jax.experimental import pallas as pl
from jax.experimental.pallas import tpu as pltpu

SMOOTH = 1e-06
LANES = 128
SUBLANES = 8
TILE_ROWS = 1024   # (1024, 128) f32 tile: ~86% of HBM roofline, VMEM-safe on v5e/v6e/v7x
NUM_CORES = 2      # v7x has 2 TensorCores; harmless small outer loop on v5e/v6e


def _dice_bce_kernel(p_ref, a_ref, out_ref, acc_ref, *, n_elems, blocks_per_core):
    """Accumulates [sum(p*a), sum(p), sum(a), sum(bce term)] as (8,128) slabs."""
    c = pl.program_id(0)   # core / outer split
    i = pl.program_id(1)   # row-block within this core's range

    @pl.when(i == 0)
    def _():
        acc_ref[...] = jnp.zeros_like(acc_ref)

    tile_rows = p_ref.shape[0]
    block_elems = tile_rows * LANES

    # Logical (unclamped) block index.  The index_map clamps the DMA source to
    # stay in bounds; the mask below zeroes duplicated / padded / out-of-range
    # elements based on this unclamped index.
    block_idx = c * blocks_per_core + i
    block_start = block_idx * block_elems
    block_end = block_start + block_elems

    p = p_ref[...].astype(jnp.float32)
    a = a_ref[...].astype(jnp.float32)

    def accumulate(p, a):
        # Keep per-lane / per-sublane partials: reduce only over the leading
        # axis (pure vreg adds, no cross-lane XLU work in the steady state).
        p3 = p.reshape(tile_rows // SUBLANES, SUBLANES, LANES)
        a3 = a.reshape(tile_rows // SUBLANES, SUBLANES, LANES)
        # torch.nn.BCELoss clamps the log terms at -100.  For f32/bf16 inputs
        # (1 - p) is exact for p >= 0.5 (Sterbenz), so log(1 - p) is as
        # accurate here as log1p(-p) while using only guaranteed-lowerable ops.
        log_p = jnp.maximum(jnp.log(p3), -100.0)
        log_1mp = jnp.maximum(jnp.log(1.0 - p3), -100.0)
        bce = a3 * log_p + (1.0 - a3) * log_1mp      # negated in the wrapper
        acc_ref[0] += jnp.sum(p3 * a3, axis=0)
        acc_ref[1] += jnp.sum(p3, axis=0)
        acc_ref[2] += jnp.sum(a3, axis=0)
        acc_ref[3] += jnp.sum(bce, axis=0)

    @pl.when(block_end <= n_elems)    # fully in-range block (steady state, no mask)
    def _():
        accumulate(p, a)

    @pl.when(block_end > n_elems)     # tail / padded / duplicated block
    def _():
        row_ids = lax.broadcasted_iota(jnp.int32, (tile_rows, LANES), 0)
        col_ids = lax.broadcasted_iota(jnp.int32, (tile_rows, LANES), 1)
        gidx = block_start + row_ids * LANES + col_ids   # global element index
        mask = gidx < n_elems
        accumulate(jnp.where(mask, p, 0.0), jnp.where(mask, a, 0.0))

    @pl.when(i == pl.num_programs(1) - 1)
    def _():
        out_ref[0] = acc_ref[...]


def dice_bce_loss(predicted, actual, smooth=SMOOTH):
    """Combined Dice + BCE loss, matching DiceBCE.forward semantics."""
    assert predicted.shape == actual.shape
    n = int(predicted.size)
    assert 0 < n < 2**31  # element-index mask uses int32

    p_flat = jnp.reshape(predicted, (-1,))
    a_flat = jnp.reshape(actual, (-1,))

    # The (rows, 128) view needs the flat size to be a multiple of 8*128; pad
    # only in that (rare) case.  Pad values are irrelevant: the in-kernel mask
    # zeroes everything at or beyond index n.
    min_chunk = SUBLANES * LANES
    n_lifted = pl.cdiv(n, min_chunk) * min_chunk
    if n_lifted != n:
        p_flat = jnp.pad(p_flat, (0, n_lifted - n))
        a_flat = jnp.pad(a_flat, (0, n_lifted - n))
    rows = n_lifted // LANES
    p2d = p_flat.reshape(rows, LANES)
    a2d = a_flat.reshape(rows, LANES)

    tile_rows = min(TILE_ROWS, rows)              # rows is a multiple of 8
    num_blocks = pl.cdiv(rows, tile_rows)
    num_cores = NUM_CORES if num_blocks >= NUM_CORES else 1
    blocks_per_core = pl.cdiv(num_blocks, num_cores)

    def in_map(c, i):
        # Clamp so the DMA never targets a fully out-of-range block; the
        # kernel masks duplicated blocks to zero via the unclamped index.
        return (jnp.minimum(c * blocks_per_core + i, num_blocks - 1), 0)

    kernel = functools.partial(
        _dice_bce_kernel, n_elems=n, blocks_per_core=blocks_per_core)

    partials = pl.pallas_call(
        kernel,
        out_shape=jax.ShapeDtypeStruct((num_cores, 4, SUBLANES, LANES), jnp.float32),
        grid_spec=pltpu.PrefetchScalarGridSpec(
            num_scalar_prefetch=0,
            grid=(num_cores, blocks_per_core),
            in_specs=[
                pl.BlockSpec((tile_rows, LANES), in_map),
                pl.BlockSpec((tile_rows, LANES), in_map),
            ],
            out_specs=pl.BlockSpec((1, 4, SUBLANES, LANES),
                                   lambda c, i: (c, 0, 0, 0)),
            scratch_shapes=[pltpu.VMEM((4, SUBLANES, LANES), jnp.float32)],
        ),
        compiler_params=pltpu.CompilerParams(
            dimension_semantics=("parallel", "arbitrary")),
    )(p2d, a2d)

    # Tiny final reduction + scalar loss math on (num_cores, 4, 8, 128) partials.
    sums = jnp.sum(partials, axis=(0, 2, 3))
    intersection, p_sum, a_sum, bce_signed = sums[0], sums[1], sums[2], sums[3]
    dice_loss = (2.0 * intersection + smooth) / (p_sum + a_sum + smooth)
    bce_loss = -bce_signed / n
    return 1.0 - dice_loss + bce_loss


def _reference(predicted, actual, smooth=SMOOTH):
    p = jnp.reshape(predicted, (-1,)).astype(jnp.float32)
    a = jnp.reshape(actual, (-1,)).astype(jnp.float32)
    inter = jnp.sum(p * a)
    dice = (2.0 * inter + smooth) / (jnp.sum(p) + jnp.sum(a) + smooth)
    bce = jnp.mean(-(a * jnp.maximum(jnp.log(p), -100.0)
                     + (1.0 - a) * jnp.maximum(jnp.log(1.0 - p), -100.0)))
    return 1.0 - dice + bce


if __name__ == "__main__":
    key = jax.random.PRNGKey(0)

    # Case 1: small segmentation-like NCHW maps (primary demo shape).
    k1, k2, key = jax.random.split(key, 3)
    shape = (2, 4, 16, 16)
    pred = jax.nn.sigmoid(jax.random.normal(k1, shape, dtype=jnp.float32))
    act = (jax.random.uniform(k2, shape) > 0.5).astype(jnp.float32)
    loss = jax.block_until_ready(dice_bce_loss(pred, act))
    ref = jax.block_until_ready(_reference(pred, act))
    assert jnp.allclose(loss, ref, rtol=1e-5, atol=1e-5), (loss, ref)

    # Case 2: ragged element count (exercises the in-kernel tail mask).
    k1, k2, key = jax.random.split(key, 3)
    shape = (2, 3, 15, 17)
    pred = jax.nn.sigmoid(jax.random.normal(k1, shape, dtype=jnp.float32))
    act = (jax.random.uniform(k2, shape) > 0.5).astype(jnp.float32)
    loss = jax.block_until_ready(dice_bce_loss(pred, act))
    ref = jax.block_until_ready(_reference(pred, act))
    assert jnp.allclose(loss, ref, rtol=1e-5, atol=1e-5), (loss, ref)

    # Case 3: bf16 inputs, multiple row-blocks (exercises the 2-way core split
    # and the native-dtype in-kernel cast).
    k1, k2, key = jax.random.split(key, 3)
    shape = (4, 4, 128, 128)
    pred = jax.nn.sigmoid(
        jax.random.normal(k1, shape, dtype=jnp.float32)).astype(jnp.bfloat16)
    act = (jax.random.uniform(k2, shape) > 0.5).astype(jnp.bfloat16)
    loss = jax.block_until_ready(dice_bce_loss(pred, act))
    ref = jax.block_until_ready(_reference(pred, act))
    assert jnp.allclose(loss, ref, rtol=1e-4, atol=1e-4), (loss, ref)

    print("KERNEL_OK")
</pallas_src>

<mosaic_0001>
module attributes {stable_mosaic.version = 11 : i64} {
  func.func @_dice_bce_kernel(%arg0: i32, %arg1: i32, %arg2: memref<16x128xf32, #tpu.memory_space<vmem>>, %arg3: memref<16x128xf32, #tpu.memory_space<vmem>>, %arg4: memref<1x4x8x128xf32, #tpu.memory_space<vmem>>, %arg5: memref<4x8x128xf32, #tpu.memory_space<vmem>>) attributes {dimension_semantics = [#tpu.dimension_semantics<parallel>, #tpu.dimension_semantics<arbitrary>], iteration_bounds = array<i64: 1, 1>, scalar_prefetch = 0 : i64, scratch_operands = 1 : i64, tpu.core_type = #tpu.core_type<tc>, window_params = [{transform_indices = @transform_0, window_bounds = array<i64: 16, 128>}, {transform_indices = @transform_1, window_bounds = array<i64: 16, 128>}, {transform_indices = @transform_2, window_bounds = array<i64: 1, 4, 8, 128>}]} {
    %c0_i32 = arith.constant 0 : i32
    %0 = arith.cmpi eq, %arg1, %c0_i32 : i32
    %1 = arith.extui %0 : i1 to i32
    %c0_i32_0 = arith.constant 0 : i32
    %2 = arith.cmpi ne, %1, %c0_i32_0 : i32
    scf.if %2 {
      %cst = arith.constant 0.000000e+00 : f32
      %18 = vector.broadcast %cst : f32 to vector<4x8x128xf32>
      %c0_11 = arith.constant 0 : index
      %c0_12 = arith.constant 0 : index
      %c0_13 = arith.constant 0 : index
      %19 = vector.load %arg5[%c0_11, %c0_12, %c0_13] : memref<4x8x128xf32, #tpu.memory_space<vmem>>, vector<4x8x128xf32>
      tpu.vector_store %arg5[%c0_11, %c0_12, %c0_13], %18 {strides = array<i32>} : memref<4x8x128xf32, #tpu.memory_space<vmem>>, vector<4x8x128xf32>,
    } else {
    }
    %c1_i32 = arith.constant 1 : i32
    %3 = arith.muli %arg0, %c1_i32 : i32
    %4 = arith.addi %3, %arg1 : i32
    %c2048_i32 = arith.constant 2048 : i32
    %5 = arith.muli %4, %c2048_i32 : i32
    %c2048_i32_1 = arith.constant 2048 : i32
    %6 = arith.addi %5, %c2048_i32_1 : i32
    %c0 = arith.constant 0 : index
    %c0_2 = arith.constant 0 : index
    %7 = vector.load %arg2[%c0, %c0_2] : memref<16x128xf32, #tpu.memory_space<vmem>>, vector<16x128xf32>
    %c0_3 = arith.constant 0 : index
    %c0_4 = arith.constant 0 : index
    %8 = vector.load %arg3[%c0_3, %c0_4] : memref<16x128xf32, #tpu.memory_space<vmem>>, vector<16x128xf32>
    %c2048_i32_5 = arith.constant 2048 : i32
    %9 = arith.cmpi sle, %6, %c2048_i32_5 : i32
    %10 = arith.extui %9 : i1 to i32
    %c0_i32_6 = arith.constant 0 : i32
    %11 = arith.cmpi ne, %10, %c0_i32_6 : i32
    scf.if %11 {
      %18 = vector.shape_cast %7 : vector<16x128xf32> to vector<2x8x128xf32>
      %19 = vector.shape_cast %8 : vector<16x128xf32> to vector<2x8x128xf32>
      %20 = math.log %18 : vector<2x8x128xf32>
      %cst = arith.constant -1.000000e+02 : f32
      %21 = vector.broadcast %cst : f32 to vector<2x8x128xf32>
      %22 = arith.maximumf %20, %21 : vector<2x8x128xf32>
      %cst_11 = arith.constant 1.000000e+00 : f32
      %23 = vector.broadcast %cst_11 : f32 to vector<2x8x128xf32>
      %24 = arith.subf %23, %18 : vector<2x8x128xf32>
      %25 = math.log %24 : vector<2x8x128xf32>
      %cst_12 = arith.constant -1.000000e+02 : f32
      %26 = vector.broadcast %cst_12 : f32 to vector<2x8x128xf32>
      %27 = arith.maximumf %25, %26 : vector<2x8x128xf32>
      %28 = arith.mulf %19, %22 : vector<2x8x128xf32>
      %cst_13 = arith.constant 1.000000e+00 : f32
      %29 = vector.broadcast %cst_13 : f32 to vector<2x8x128xf32>
      %30 = arith.subf %29, %19 : vector<2x8x128xf32>
      %31 = arith.mulf %30, %27 : vector<2x8x128xf32>
      %32 = arith.addf %28, %31 : vector<2x8x128xf32>
      %c0_14 = arith.constant 0 : index
      %c0_15 = arith.constant 0 : index
      %c0_16 = arith.constant 0 : index
      %33 = vector.load %arg5[%c0_14, %c0_15, %c0_16] : memref<4x8x128xf32, #tpu.memory_space<vmem>>, vector<1x8x128xf32>
      %34 = vector.shape_cast %33 : vector<1x8x128xf32> to vector<8x128xf32>
      %35 = arith.mulf %18, %19 : vector<2x8x128xf32>
      %cst_17 = arith.constant dense<0.000000e+00> : vector<8x128xf32>
      %36 = vector.multi_reduction <add>, %35, %cst_17 [0] : vector<2x8x128xf32> to vector<8x128xf32>
      %37 = arith.addf %34, %36 : vector<8x128xf32>
      %c0_18 = arith.constant 0 : index
      %c0_19 = arith.constant 0 : index
      %c0_20 = arith.constant 0 : index
      %38 = vector.load %arg5[%c0_18, %c0_19, %c0_20] : memref<4x8x128xf32, #tpu.memory_space<vmem>>, vector<1x8x128xf32>
      %39 = vector.shape_cast %38 : vector<1x8x128xf32> to vector<8x128xf32>
      %40 = vector.shape_cast %37 : vector<8x128xf32> to vector<1x8x128xf32>
      tpu.vector_store %arg5[%c0_18, %c0_19, %c0_20], %40 {strides = array<i32>} : memref<4x8x128xf32, #tpu.memory_space<vmem>>, vector<1x8x128xf32>,
      %c1 = arith.constant 1 : index
      %c0_21 = arith.constant 0 : index
      %c0_22 = arith.constant 0 : index
      %41 = vector.load %arg5[%c1, %c0_21, %c0_22] : memref<4x8x128xf32, #tpu.memory_space<vmem>>, vector<1x8x128xf32>
      %42 = vector.shape_cast %41 : vector<1x8x128xf32> to vector<8x128xf32>
      %cst_23 = arith.constant dense<0.000000e+00> : vector<8x128xf32>
      %43 = vector.multi_reduction <add>, %18, %cst_23 [0] : vector<2x8x128xf32> to vector<8x128xf32>
      %44 = arith.addf %42, %43 : vector<8x128xf32>
      %c1_24 = arith.constant 1 : index
      %c0_25 = arith.constant 0 : index
      %c0_26 = arith.constant 0 : index
      %45 = vector.load %arg5[%c1_24, %c0_25, %c0_26] : memref<4x8x128xf32, #tpu.memory_space<vmem>>, vector<1x8x128xf32>
      %46 = vector.shape_cast %45 : vector<1x8x128xf32> to vector<8x128xf32>
      %47 = vector.shape_cast %44 : vector<8x128xf32> to vector<1x8x128xf32>
      tpu.vector_store %arg5[%c1_24, %c0_25, %c0_26], %47 {strides = array<i32>} : memref<4x8x128xf32, #tpu.memory_space<vmem>>, vector<1x8x128xf32>,
      %c2 = arith.constant 2 : index
      %c0_27 = arith.constant 0 : index
      %c0_28 = arith.constant 0 : index
      %48 = vector.load %arg5[%c2, %c0_27, %c0_28] : memref<4x8x128xf32, #tpu.memory_space<vmem>>, vector<1x8x128xf32>
      %49 = vector.shape_cast %48 : vector<1x8x128xf32> to vector<8x128xf32>
      %cst_29 = arith.constant dense<0.000000e+00> : vector<8x128xf32>
      %50 = vector.multi_reduction <add>, %19, %cst_29 [0] : vector<2x8x128xf32> to vector<8x128xf32>
      %51 = arith.addf %49, %50 : vector<8x128xf32>
      %c2_30 = arith.constant 2 : index
      %c0_31 = arith.constant 0 : index
      %c0_32 = arith.constant 0 : index
      %52 = vector.load %arg5[%c2_30, %c0_31, %c0_32] : memref<4x8x128xf32, #tpu.memory_space<vmem>>, vector<1x8x128xf32>
      %53 = vector.shape_cast %52 : vector<1x8x128xf32> to vector<8x128xf32>
      %54 = vector.shape_cast %51 : vector<8x128xf32> to vector<1x8x128xf32>
      tpu.vector_store %arg5[%c2_30, %c0_31, %c0_32], %54 {strides = array<i32>} : memref<4x8x128xf32, #tpu.memory_space<vmem>>, vector<1x8x128xf32>,
      %c3 = arith.constant 3 : index
      %c0_33 = arith.constant 0 : index
      %c0_34 = arith.constant 0 : index
      %55 = vector.load %arg5[%c3, %c0_33, %c0_34] : memref<4x8x128xf32, #tpu.memory_space<vmem>>, vector<1x8x128xf32>
      %56 = vector.shape_cast %55 : vector<1x8x128xf32> to vector<8x128xf32>
      %cst_35 = arith.constant dense<0.000000e+00> : vector<8x128xf32>
      %57 = vector.multi_reduction <add>, %32, %cst_35 [0] : vector<2x8x128xf32> to vector<8x128xf32>
      %58 = arith.addf %56, %57 : vector<8x128xf32>
      %c3_36 = arith.constant 3 : index
      %c0_37 = arith.constant 0 : index
      %c0_38 = arith.constant 0 : index
      %59 = vector.load %arg5[%c3_36, %c0_37, %c0_38] : memref<4x8x128xf32, #tpu.memory_space<vmem>>, vector<1x8x128xf32>
      %60 = vector.shape_cast %59 : vector<1x8x128xf32> to vector<8x128xf32>
      %61 = vector.shape_cast %58 : vector<8x128xf32> to vector<1x8x128xf32>
      tpu.vector_store %arg5[%c3_36, %c0_37, %c0_38], %61 {strides = array<i32>} : memref<4x8x128xf32, #tpu.memory_space<vmem>>, vector<1x8x128xf32>,
    } else {
    }
    %c2048_i32_7 = arith.constant 2048 : i32
    %12 = arith.cmpi sgt, %6, %c2048_i32_7 : i32
    %13 = arith.extui %12 : i1 to i32
    %c0_i32_8 = arith.constant 0 : i32
    %14 = arith.cmpi ne, %13, %c0_i32_8 : i32
    scf.if %14 {
      %18 = tpu.iota {dimensions = array<i32: 0>} : vector<16x128xi32>
      %19 = tpu.iota {dimensions = array<i32: 1>} : vector<16x128xi32>
      %c128_i32 = arith.constant 128 : i32
      %20 = vector.broadcast %c128_i32 : i32 to vector<16x128xi32>
      %21 = arith.muli %18, %20 : vector<16x128xi32>
      %22 = vector.broadcast %5 : i32 to vector<16x128xi32>
      %23 = arith.addi %22, %21 : vector<16x128xi32>
      %24 = arith.addi %23, %19 : vector<16x128xi32>
      %c2048_i32_11 = arith.constant 2048 : i32
      %25 = vector.broadcast %c2048_i32_11 : i32 to vector<16x128xi32>
      %26 = arith.cmpi slt, %24, %25 : vector<16x128xi32>
      %cst = arith.constant 0.000000e+00 : f32
      %27 = vector.broadcast %cst : f32 to vector<16x128xf32>
      %28 = arith.select %26, %7, %27 : vector<16x128xi1>, vector<16x128xf32>
      %cst_12 = arith.constant 0.000000e+00 : f32
      %29 = vector.broadcast %cst_12 : f32 to vector<16x128xf32>
      %30 = arith.select %26, %8, %29 : vector<16x128xi1>, vector<16x128xf32>
      %31 = vector.shape_cast %28 : vector<16x128xf32> to vector<2x8x128xf32>
      %32 = vector.shape_cast %30 : vector<16x128xf32> to vector<2x8x128xf32>
      %33 = math.log %31 : vector<2x8x128xf32>
      %cst_13 = arith.constant -1.000000e+02 : f32
      %34 = vector.broadcast %cst_13 : f32 to vector<2x8x128xf32>
      %35 = arith.maximumf %33, %34 : vector<2x8x128xf32>
      %cst_14 = arith.constant 1.000000e+00 : f32
      %36 = vector.broadcast %cst_14 : f32 to vector<2x8x128xf32>
      %37 = arith.subf %36, %31 : vector<2x8x128xf32>
      %38 = math.log %37 : vector<2x8x128xf32>
      %cst_15 = arith.constant -1.000000e+02 : f32
      %39 = vector.broadcast %cst_15 : f32 to vector<2x8x128xf32>
      %40 = arith.maximumf %38, %39 : vector<2x8x128xf32>
      %41 = arith.mulf %32, %35 : vector<2x8x128xf32>
      %cst_16 = arith.constant 1.000000e+00 : f32
      %42 = vector.broadcast %cst_16 : f32 to vector<2x8x128xf32>
      %43 = arith.subf %42, %32 : vector<2x8x128xf32>
      %44 = arith.mulf %43, %40 : vector<2x8x128xf32>
      %45 = arith.addf %41, %44 : vector<2x8x128xf32>
      %c0_17 = arith.constant 0 : index
      %c0_18 = arith.constant 0 : index
      %c0_19 = arith.constant 0 : index
      %46 = vector.load %arg5[%c0_17, %c0_18, %c0_19] : memref<4x8x128xf32, #tpu.memory_space<vmem>>, vector<1x8x128xf32>
      %47 = vector.shape_cast %46 : vector<1x8x128xf32> to vector<8x128xf32>
      %48 = arith.mulf %31, %32 : vector<2x8x128xf32>
      %cst_20 = arith.constant dense<0.000000e+00> : vector<8x128xf32>
      %49 = vector.multi_reduction <add>, %48, %cst_20 [0] : vector<2x8x128xf32> to vector<8x128xf32>
      %50 = arith.addf %47, %49 : vector<8x128xf32>
      %c0_21 = arith.constant 0 : index
      %c0_22 = arith.constant 0 : index
      %c0_23 = arith.constant 0 : index
      %51 = vector.load %arg5[%c0_21, %c0_22, %c0_23] : memref<4x8x128xf32, #tpu.memory_space<vmem>>, vector<1x8x128xf32>
      %52 = vector.shape_cast %51 : vector<1x8x128xf32> to vector<8x128xf32>
      %53 = vector.shape_cast %50 : vector<8x128xf32> to vector<1x8x128xf32>
      tpu.vector_store %arg5[%c0_21, %c0_22, %c0_23], %53 {strides = array<i32>} : memref<4x8x128xf32, #tpu.memory_space<vmem>>, vector<1x8x128xf32>,
      %c1 = arith.constant 1 : index
      %c0_24 = arith.constant 0 : index
      %c0_25 = arith.constant 0 : index
      %54 = vector.load %arg5[%c1, %c0_24, %c0_25] : memref<4x8x128xf32, #tpu.memory_space<vmem>>, vector<1x8x128xf32>
      %55 = vector.shape_cast %54 : vector<1x8x128xf32> to vector<8x128xf32>
      %cst_26 = arith.constant dense<0.000000e+00> : vector<8x128xf32>
      %56 = vector.multi_reduction <add>, %31, %cst_26 [0] : vector<2x8x128xf32> to vector<8x128xf32>
      %57 = arith.addf %55, %56 : vector<8x128xf32>
      %c1_27 = arith.constant 1 : index
      %c0_28 = arith.constant 0 : index
      %c0_29 = arith.constant 0 : index
      %58 = vector.load %arg5[%c1_27, %c0_28, %c0_29] : memref<4x8x128xf32, #tpu.memory_space<vmem>>, vector<1x8x128xf32>
      %59 = vector.shape_cast %58 : vector<1x8x128xf32> to vector<8x128xf32>
      %60 = vector.shape_cast %57 : vector<8x128xf32> to vector<1x8x128xf32>
      tpu.vector_store %arg5[%c1_27, %c0_28, %c0_29], %60 {strides = array<i32>} : memref<4x8x128xf32, #tpu.memory_space<vmem>>, vector<1x8x128xf32>,
      %c2 = arith.constant 2 : index
      %c0_30 = arith.constant 0 : index
      %c0_31 = arith.constant 0 : index
      %61 = vector.load %arg5[%c2, %c0_30, %c0_31] : memref<4x8x128xf32, #tpu.memory_space<vmem>>, vector<1x8x128xf32>
      %62 = vector.shape_cast %61 : vector<1x8x128xf32> to vector<8x128xf32>
      %cst_32 = arith.constant dense<0.000000e+00> : vector<8x128xf32>
      %63 = vector.multi_reduction <add>, %32, %cst_32 [0] : vector<2x8x128xf32> to vector<8x128xf32>
      %64 = arith.addf %62, %63 : vector<8x128xf32>
      %c2_33 = arith.constant 2 : index
      %c0_34 = arith.constant 0 : index
      %c0_35 = arith.constant 0 : index
      %65 = vector.load %arg5[%c2_33, %c0_34, %c0_35] : memref<4x8x128xf32, #tpu.memory_space<vmem>>, vector<1x8x128xf32>
      %66 = vector.shape_cast %65 : vector<1x8x128xf32> to vector<8x128xf32>
      %67 = vector.shape_cast %64 : vector<8x128xf32> to vector<1x8x128xf32>
      tpu.vector_store %arg5[%c2_33, %c0_34, %c0_35], %67 {strides = array<i32>} : memref<4x8x128xf32, #tpu.memory_space<vmem>>, vector<1x8x128xf32>,
      %c3 = arith.constant 3 : index
      %c0_36 = arith.constant 0 : index
      %c0_37 = arith.constant 0 : index
      %68 = vector.load %arg5[%c3, %c0_36, %c0_37] : memref<4x8x128xf32, #tpu.memory_space<vmem>>, vector<1x8x128xf32>
      %69 = vector.shape_cast %68 : vector<1x8x128xf32> to vector<8x128xf32>
      %cst_38 = arith.constant dense<0.000000e+00> : vector<8x128xf32>
      %70 = vector.multi_reduction <add>, %45, %cst_38 [0] : vector<2x8x128xf32> to vector<8x128xf32>
      %71 = arith.addf %69, %70 : vector<8x128xf32>
      %c3_39 = arith.constant 3 : index
      %c0_40 = arith.constant 0 : index
      %c0_41 = arith.constant 0 : index
      %72 = vector.load %arg5[%c3_39, %c0_40, %c0_41] : memref<4x8x128xf32, #tpu.memory_space<vmem>>, vector<1x8x128xf32>
      %73 = vector.shape_cast %72 : vector<1x8x128xf32> to vector<8x128xf32>
      %74 = vector.shape_cast %71 : vector<8x128xf32> to vector<1x8x128xf32>
      tpu.vector_store %arg5[%c3_39, %c0_40, %c0_41], %74 {strides = array<i32>} : memref<4x8x128xf32, #tpu.memory_space<vmem>>, vector<1x8x128xf32>,
    } else {
    }
    %c0_i32_9 = arith.constant 0 : i32
    %15 = arith.cmpi eq, %arg1, %c0_i32_9 : i32
    %16 = arith.extui %15 : i1 to i32
    %c0_i32_10 = arith.constant 0 : i32
    %17 = arith.cmpi ne, %16, %c0_i32_10 : i32
    scf.if %17 {
      %c0_11 = arith.constant 0 : index
      %c0_12 = arith.constant 0 : index
      %c0_13 = arith.constant 0 : index
      %18 = vector.load %arg5[%c0_11, %c0_12, %c0_13] : memref<4x8x128xf32, #tpu.memory_space<vmem>>, vector<4x8x128xf32>
      %c0_14 = arith.constant 0 : index
      %c0_15 = arith.constant 0 : index
      %c0_16 = arith.constant 0 : index
      %c0_17 = arith.constant 0 : index
      %19 = vector.load %arg4[%c0_14, %c0_15, %c0_16, %c0_17] : memref<1x4x8x128xf32, #tpu.memory_space<vmem>>, vector<1x4x8x128xf32>
      %20 = vector.shape_cast %19 : vector<1x4x8x128xf32> to vector<4x8x128xf32>
      %21 = vector.shape_cast %18 : vector<4x8x128xf32> to vector<1x4x8x128xf32>
      tpu.vector_store %arg4[%c0_14, %c0_15, %c0_16, %c0_17], %21 {strides = array<i32>} : memref<1x4x8x128xf32, #tpu.memory_space<vmem>>, vector<1x4x8x128xf32>,
    } else {
    }
    return
  }
  func.func @transform_0(%arg0: i32, %arg1: i32) -> (i32, i32) {
    %c1_i32 = arith.constant 1 : i32
    %0 = arith.muli %arg0, %c1_i32 : i32
    %1 = arith.addi %0, %arg1 : i32
    %c0_i32 = arith.constant 0 : i32
    %2 = arith.minsi %1, %c0_i32 : i32
    %c0_i32_0 = arith.constant 0 : i32
    %c0_i32_1 = arith.constant 0 : i32
    return %2, %c0_i32_0 : i32, i32
  }
  func.func @transform_1(%arg0: i32, %arg1: i32) -> (i32, i32) {
    %c1_i32 = arith.constant 1 : i32
    %0 = arith.muli %arg0, %c1_i32 : i32
    %1 = arith.addi %0, %arg1 : i32
    %c0_i32 = arith.constant 0 : i32
    %2 = arith.minsi %1, %c0_i32 : i32
    %c0_i32_0 = arith.constant 0 : i32
    %c0_i32_1 = arith.constant 0 : i32
    return %2, %c0_i32_0 : i32, i32
  }
  func.func @transform_2(%arg0: i32, %arg1: i32) -> (i32, i32, i32, i32) {
    %c0_i32 = arith.constant 0 : i32
    %c0_i32_0 = arith.constant 0 : i32
    %c0_i32_1 = arith.constant 0 : i32
    %c0_i32_2 = arith.constant 0 : i32
    return %arg0, %c0_i32, %c0_i32_0, %c0_i32_1 : i32, i32, i32, i32
  }
}

</mosaic_0001>

<llo_original>
// kernel: tpu_custom_call.1
$region0: #{tpu_custom_call.1}
  #allocation0 [shape = 'u32[]', space=smem, size = 0x4, offset = 0x4, fixed_abs, tag = 'smem constant byte address 0x4 - core index']
  #allocation1 [shape = 'u32[144,128]{1,0:T(1,128)}', space=vmem, size = 0x12000, scoped, tag = 'internal scratch']
  #allocation2 [shape = 'f32[4,8,128]{2,1,0:T(8,128)}', space=vmem, size = 0x4000, scoped, tag = 'scratch operand']
  %s0 = inlined_call_operand.hbm [shape: f32[16,128], index: 0, kind: input, shape index: {}]
  %s1 = inlined_call_operand.hbm [shape: f32[16,128], index: 1, kind: input, shape index: {}]
  %s2 = inlined_call_operand.hbm [shape: f32[1,4,8,128], index: 2, kind: output, shape index: {}]
  %s3 = sld [smem:[#allocation0]]
  $region42: #{tpu_custom_call.1} parent=0
    _
  %s5 = ssub.s32 1, %s3
  %s6 = scalar_select 0, %s5, %s3
  $region1: #{tpu_custom_call.1} parent=0
    #allocation3 [shape = 'u8[8192]{0}', space=vmem, size = 0x2000, scoped, tag = 'input window, operand 0, single buffered']
    #allocation4 [shape = 's32[1]{0}', space=sflag, size = 0x4, scoped, tag = 'scoped memory for tpu_custom_call.1']
    #allocation5 [shape = 's32[1]{0}', space=sflag, size = 0x4, scoped, tag = 'scoped memory for tpu_custom_call.1']
    #allocation6 [shape = 'u8[8192]{0}', space=vmem, size = 0x2000, scoped, tag = 'input window, operand 1, single buffered']
    #allocation7 [shape = 's32[1]{0}', space=sflag, size = 0x4, scoped, tag = 'scoped memory for tpu_custom_call.1']
    #allocation8 [shape = 'u8[16384]{0}', space=vmem, size = 0x4000, scoped, tag = 'output window, operand 0, single buffered']
    %7 = vsyncpa [#allocation4], 0
    %8 = vsyncpa [#allocation7], 0
    %9 = vsyncpa [#allocation5], 0
    // Predicated region
    $region2: #{tpu_custom_call.1} parent=1 // pred_check
      _
    $region3: #{tpu_custom_call.1} parent=1 // pred_check_branch
      %11 = sbr.rel (0) target = $region5
    $region4: #{tpu_custom_call.1} parent=1 // pred_region
      %s12 = sadd.s32 0, 0
      %p13 = scmp.lt.s32.totalorder %s12, 0
      %s14 = scalar_select %p13, %s12, 0
      %s15 = smul.u32 2, %s14
      %s17 = ssub.s32 256, 256
      %18 = vsyncadd [#allocation4], %s17
      %s19 = smul.addr %s15, 128
      %s20 = scalar_lea.hbm %s0, %s19
      %s21 = sshll.u32 [#allocation3], 4
      %s22 = int_to_ptr.vmem [resolvable:$true] %s21
      %27 = dma.hbm_to_vmem [thread:$0]  %s20, 256, %s22, [#allocation4], 128, 128, 8
    $region5: #{tpu_custom_call.1} parent=1 // pred_fallthru
      _
    // Predicated region
    $region6: #{tpu_custom_call.1} parent=1 // pred_check
      _
    $region7: #{tpu_custom_call.1} parent=1 // pred_check_branch
      %29 = sbr.rel (0) target = $region9
    $region8: #{tpu_custom_call.1} parent=1 // pred_region
      %s30 = sadd.s32 0, 0
      %p31 = scmp.lt.s32.totalorder %s30, 0
      %s32 = scalar_select %p31, %s30, 0
      %s33 = smul.u32 2, %s32
      %s35 = ssub.s32 256, 256
      %36 = vsyncadd [#allocation7], %s35
      %s37 = smul.addr %s33, 128
      %s38 = scalar_lea.hbm %s1, %s37
      %s39 = sshll.u32 [#allocation6], 4
      %s40 = int_to_ptr.vmem [resolvable:$true] %s39
      %45 = dma.hbm_to_vmem [thread:$0]  %s38, 256, %s40, [#allocation7], 128, 128, 8
    $region9: #{tpu_custom_call.1} parent=1 // pred_fallthru
      _
    // Predicated region
    $region10: #{tpu_custom_call.1} parent=1 // pred_check
      _
    $region11: #{tpu_custom_call.1} parent=1 // pred_check_branch
      %47 = sbr.rel (0) target = $region13
    $region12: #{tpu_custom_call.1} parent=1 // pred_region
      %48 = dma.done [#allocation4], 256
    $region13: #{tpu_custom_call.1} parent=1 // pred_fallthru
      _
    // Predicated region
    $region14: #{tpu_custom_call.1} parent=1 // pred_check
      _
    $region15: #{tpu_custom_call.1} parent=1 // pred_check_branch
      %50 = sbr.rel (0) target = $region17
    $region16: #{tpu_custom_call.1} parent=1 // pred_region
      %51 = dma.done [#allocation7], 256
    $region17: #{tpu_custom_call.1} parent=1 // pred_fallthru
      _
    %s52 = sadd.s32 0, 0
    %p53 = scmp.lt.s32.totalorder %s52, 0
    %s54 = scalar_select %p53, %s52, 0
    %s55 = smul.u32 2, %s54
    %s56 = sadd.s32 0, 0
    %p57 = scmp.lt.s32.totalorder %s56, 0
    %s58 = scalar_select %p57, %s56, 0
    %s59 = smul.u32 2, %s58
    %p60 = scmp.eq.s32.totalorder 0, 0
    // Predicated region
    $region18: #{tpu_custom_call.1} parent=1 // pred_check
      %p61 = pneg %p60
    $region19: #{tpu_custom_call.1} parent=1 // pred_check_branch
      %63 = sbr.rel (%p61) target = $region21
    $region20: #{tpu_custom_call.1} parent=1 // pred_region
      %64 = vst [vmem:[#allocation2] sm:$0xff] 0.0
      %65 = vst [vmem:[#allocation2 + $0x8] sm:$0xff] 0.0
      %66 = vst [vmem:[#allocation2 + $0x10] sm:$0xff] 0.0
      %67 = vst [vmem:[#allocation2 + $0x18] sm:$0xff] 0.0
    $region21: #{tpu_custom_call.1} parent=1 // pred_fallthru
      _
    %s68 = sadd.s32 0, 0
    %s69 = smul.u32 %s68, 2048
    %s70 = sadd.s32 %s69, 2048
    %v71 = vld [vmem:[#allocation3] sm:$0xff]
    %v72 = vld [vmem:[#allocation3 + $0x8] sm:$0xff]
    %v73 = vld [vmem:[#allocation6] sm:$0xff]
    %v74 = vld [vmem:[#allocation6 + $0x8] sm:$0xff]
    %p75 = scmp.le.s32.totalorder %s70, 2048
    // Predicated region
    $region22: #{tpu_custom_call.1} parent=1 // pred_check
      %p76 = pneg %p75
    $region23: #{tpu_custom_call.1} parent=1 // pred_check_branch
      %78 = sbr.rel (%p76) target = $region25
    $region24: #{tpu_custom_call.1} parent=1 // pred_region
      %v79 = vlog2.pop %v71
      %v80 = vmul.f32 %v79, 0.6931472
      %v81 = vlog2.pop %v72
      %v82 = vmul.f32 %v81, 0.6931472
      %v83 = vmax.f32 %v80, -100.0
      %v84 = vmax.f32 %v82, -100.0
      %v85 = vsub.f32 1.0, %v71
      %v86 = vsub.f32 1.0, %v72
      %v87 = vlog2.pop %v85
      %v88 = vmul.f32 %v87, 0.6931472
      %v89 = vlog2.pop %v86
      %v90 = vmul.f32 %v89, 0.6931472
      %v91 = vmax.f32 %v88, -100.0
      %v92 = vmax.f32 %v90, -100.0
      %v93 = vmul.f32 %v73, %v83
      %v94 = vmul.f32 %v74, %v84
      %v95 = vsub.f32 1.0, %v73
      %v96 = vsub.f32 1.0, %v74
      %v97 = vmul.f32 %v95, %v91
      %v98 = vmul.f32 %v96, %v92
      %v99 = vadd.f32 %v93, %v97
      %v100 = vadd.f32 %v94, %v98
      %v101 = vld [vmem:[#allocation2] sm:$0xff]
      %v102 = vmul.f32 %v71, %v73
      %v103 = vmul.f32 %v72, %v74
      %v104 = vadd.f32 %v102, %v103
      %v105 = vadd.f32 %v101, %v104
      %106 = vst [vmem:[#allocation2] sm:$0xff] %v105
      %s107 = scalar_lea.vmem [#allocation2], 8
      %v108 = vld [vmem:[%s107] sm:$0xff]
      %v109 = vadd.f32 %v71, %v72
      %v110 = vadd.f32 %v108, %v109
      %111 = vst [vmem:[%s107] sm:$0xff] %v110
      %s112 = scalar_lea.vmem [#allocation2], 16
      %v113 = vld [vmem:[%s112] sm:$0xff]
      %v114 = vadd.f32 %v73, %v74
      %v115 = vadd.f32 %v113, %v114
      %116 = vst [vmem:[%s112] sm:$0xff] %v115
      %s117 = scalar_lea.vmem [#allocation2], 24
      %v118 = vld [vmem:[%s117] sm:$0xff]
      %v119 = vadd.f32 %v99, %v100
      %v120 = vadd.f32 %v118, %v119
      %121 = vst [vmem:[%s117] sm:$0xff] %v120
    $region25: #{tpu_custom_call.1} parent=1 // pred_fallthru
      _
    %p122 = scmp.gt.s32.totalorder %s70, 2048
    // Predicated region
    $region26: #{tpu_custom_call.1} parent=1 // pred_check
      %p123 = pneg %p122
    $region27: #{tpu_custom_call.1} parent=1 // pred_check_branch
      %125 = sbr.rel (%p123) target = $region29
    $region28: #{tpu_custom_call.1} parent=1 // pred_region
      %v126 = vlaneseq
      %v127 = vshrl.u32 %v126, 7
      %v128 = vadd.s32 %v127, 8
      %v129 = vlaneseq
      %v130 = vand.u32 %v129, 127
      %v131 = vmul.u32 %v127, 128
      %v132 = vmul.u32 %v128, 128
      %v133 = vstv %s69
      %v134 = vadd.s32 %v133, %v131
      %v135 = vadd.s32 %v133, %v132
      %v136 = vadd.s32 %v134, %v130
      %v137 = vadd.s32 %v135, %v130
      %vm138 = vcmp.lt.s32.totalorder %v136, 2048
      %vm139 = vcmp.lt.s32.totalorder %v137, 2048
      %v140 = vsel %vm138, %v71, 0.0
      %v141 = vsel %vm139, %v72, 0.0
      %v142 = vsel %vm138, %v73, 0.0
      %v143 = vsel %vm139, %v74, 0.0
      %v144 = vlog2.pop %v140
      %v145 = vmul.f32 %v144, 0.6931472
      %v146 = vlog2.pop %v141
      %v147 = vmul.f32 %v146, 0.6931472
      %v148 = vmax.f32 %v145, -100.0
      %v149 = vmax.f32 %v147, -100.0
      %v150 = vsub.f32 1.0, %v140
      %v151 = vsub.f32 1.0, %v141
      %v152 = vlog2.pop %v150
      %v153 = vmul.f32 %v152, 0.6931472
      %v154 = vlog2.pop %v151
      %v155 = vmul.f32 %v154, 0.6931472
      %v156 = vmax.f32 %v153, -100.0
      %v157 = vmax.f32 %v155, -100.0
      %v158 = vmul.f32 %v142, %v148
      %v159 = vmul.f32 %v143, %v149
      %v160 = vsub.f32 1.0, %v142
      %v161 = vsub.f32 1.0, %v143
      %v162 = vmul.f32 %v160, %v156
      %v163 = vmul.f32 %v161, %v157
      %v164 = vadd.f32 %v158, %v162
      %v165 = vadd.f32 %v159, %v163
      %v166 = vld [vmem:[#allocation2] sm:$0xff]
      %v167 = vmul.f32 %v140, %v142
      %v168 = vmul.f32 %v141, %v143
      %v169 = vadd.f32 %v167, %v168
      %v170 = vadd.f32 %v166, %v169
      %171 = vst [vmem:[#allocation2] sm:$0xff] %v170
      %s172 = scalar_lea.vmem [#allocation2], 8
      %v173 = vld [vmem:[%s172] sm:$0xff]
      %v174 = vadd.f32 %v140, %v141
      %v175 = vadd.f32 %v173, %v174
      %176 = vst [vmem:[%s172] sm:$0xff] %v175
      %s177 = scalar_lea.vmem [#allocation2], 16
      %v178 = vld [vmem:[%s177] sm:$0xff]
      %v179 = vadd.f32 %v142, %v143
      %v180 = vadd.f32 %v178, %v179
      %181 = vst [vmem:[%s177] sm:$0xff] %v180
      %s182 = scalar_lea.vmem [#allocation2], 24
      %v183 = vld [vmem:[%s182] sm:$0xff]
      %v184 = vadd.f32 %v164, %v165
      %v185 = vadd.f32 %v183, %v184
      %186 = vst [vmem:[%s182] sm:$0xff] %v185
    $region29: #{tpu_custom_call.1} parent=1 // pred_fallthru
      _
    // Predicated region
    $region30: #{tpu_custom_call.1} parent=1 // pred_check
      %p187 = pneg %p60
    $region31: #{tpu_custom_call.1} parent=1 // pred_check_branch
      %189 = sbr.rel (%p187) target = $region33
    $region32: #{tpu_custom_call.1} parent=1 // pred_region
      %v190 = vld [vmem:[#allocation2] sm:$0xff]
      %v191 = vld [vmem:[#allocation2 + $0x8] sm:$0xff]
      %v192 = vld [vmem:[#allocation2 + $0x10] sm:$0xff]
      %v193 = vld [vmem:[#allocation2 + $0x18] sm:$0xff]
      %194 = vst [vmem:[#allocation8] sm:$0xff] %v190
      %195 = vst [vmem:[#allocation8 + $0x8] sm:$0xff] %v191
      %196 = vst [vmem:[#allocation8 + $0x10] sm:$0xff] %v192
      %197 = vst [vmem:[#allocation8 + $0x18] sm:$0xff] %v193
    $region33: #{tpu_custom_call.1} parent=1 // pred_fallthru
      _
    // Predicated region
    $region34: #{tpu_custom_call.1} parent=1 // pred_check
      _
    $region35: #{tpu_custom_call.1} parent=1 // pred_check_branch
      %199 = sbr.rel (0) target = $region37
    $region36: #{tpu_custom_call.1} parent=1 // pred_region
      %s201 = ssub.s32 512, 512
      %202 = vsyncadd [#allocation5], %s201
      %s203 = sshll.u32 [#allocation8], 4
      %s204 = int_to_ptr.vmem [resolvable:$true] %s203
      %209 = dma.vmem_to_hbm [thread:$0]  %s204, 512, %s2, [#allocation5], 128, 128, 8
    $region37: #{tpu_custom_call.1} parent=1 // pred_fallthru
      _
    // Predicated region
    $region38: #{tpu_custom_call.1} parent=1 // pred_check
      _
    $region39: #{tpu_custom_call.1} parent=1 // pred_check_branch
      %211 = sbr.rel (0) target = $region41
    $region40: #{tpu_custom_call.1} parent=1 // pred_region
      %212 = dma.done [#allocation5], 512
    $region41: #{tpu_custom_call.1} parent=1 // pred_fallthru
      _
    %213 = vsyncpa [#allocation4], 1
    %214 = vsyncpa [#allocation7], 1
    %215 = vsyncpa [#allocation5], 1

</llo_original>
